<compile_context>
chip_gen: v7x
topology: tpu7x:2x2x1
jax: 0.10.0
libtpu: 0.0.40
codegen_flags: <defaults>
</compile_context>

<pallas_src>
import functools

import jax
import jax.numpy as jnp
from jax.experimental import pallas as pl
from jax.experimental.pallas import tpu as pltpu


def _round_up(x, m):
    return (x + m - 1) // m * m


def _cdiv(a, b):
    return -(-a // b)


def policy_act_kernel(feat_ref, w_ref, b_ref, out_ref, *, num_actions):
    feat = feat_ref[...]                                         # (bb, H), native dtype

    # Fused actor+critic matmul: cols [0, A) are logits, col A is the value.
    fused = jnp.dot(feat, w_ref[...],
                    preferred_element_type=jnp.float32) + b_ref[...]   # (bb, C) f32

    col = jax.lax.broadcasted_iota(jnp.int32, fused.shape, 1)
    is_logit = col < num_actions

    # log-softmax pieces (padded columns masked to -inf -> exp() gives exact 0)
    logits = jnp.where(is_logit, fused, -jnp.inf)
    m = jnp.max(logits, axis=-1, keepdims=True)                  # (bb, 1)
    p = jnp.exp(logits - m)                                      # padded lanes -> 0
    lse = jnp.log(jnp.sum(p, axis=-1, keepdims=True))            # (bb, 1)

    # deterministic action = argmax(logits); its log_prob = (max - max) - lse = -lse
    alp = -lse                                                   # (bb, 1)
    action_f = jnp.argmax(logits, axis=-1).astype(jnp.float32)[:, None]   # (bb, 1)

    # value lives in column `num_actions` of the fused result (static slice)
    value = fused[:, num_actions:num_actions + 1]                # (bb, 1)

    # single lane-dense packed output slab (unmasked full-width store):
    #   lane0 = value, lane1 = log_prob, lane2 = action (float-encoded int)
    lane = jax.lax.broadcasted_iota(jnp.int32, out_ref.shape, 1)
    out_ref[...] = jnp.where(lane == 0, value,
                             jnp.where(lane == 1, alp,
                                       jnp.where(lane == 2, action_f, 0.0)))


def make_fused_params(wa, ba, wc, bc, *, dtype=jnp.float32):
    """Build the fused actor+critic weight/bias ONCE (hoisted out of act()).

    wa: (H, A) actor weight (transposed nn.Linear), ba: (1, A) actor bias,
    wc: (H, 1) critic weight, bc: (1, 1) critic bias.
    Returns w: (H, C) in `dtype`, b: (1, C) f32, with C = round_up(A+1, 128).
    Column layout: [0, A) = logits, A = value, rest zero padding.
    """
    H, A = wa.shape
    C = _round_up(A + 1, 128)
    w = jnp.zeros((H, C), dtype)
    w = w.at[:, :A].set(wa.astype(dtype))
    w = w.at[:, A].set(wc[:, 0].astype(dtype))
    b = jnp.zeros((1, C), jnp.float32)
    b = b.at[0, :A].set(ba.reshape(-1).astype(jnp.float32))
    b = b.at[0, A].set(bc.reshape(()).astype(jnp.float32))
    return w, b


def policy_act(features, w_fused, b_fused, *, num_actions, block_b=2048):
    """features: (B, H); w_fused: (H, C); b_fused: (1, C) from make_fused_params.

    Returns (value (B,1) f32, action (B,1) i32, action_log_probs (B,1) f32).
    """
    B, H = features.shape
    C = w_fused.shape[1]
    A = num_actions
    assert w_fused.shape[0] == H and A + 1 <= C

    # Match the MXU operand dtype to the fused weight (enables the bf16 fast path).
    if features.dtype != w_fused.dtype:
        features = features.astype(w_fused.dtype)

    B8 = _round_up(max(B, 1), 8)
    bb = min(_round_up(block_b, 8), B8)
    # v7x: make sure large batches split into >= 2 grid steps so the "parallel"
    # batch axis actually shards across both TensorCores.
    if B8 >= 1024:
        bb = min(bb, _round_up(_cdiv(B8, 2), 8))
    grid_b = _cdiv(B, bb)
    B_pad = grid_b * bb          # outputs are fully in-bounds; inputs may overrun
                                 # on the last block (garbage rows sliced off below)

    kernel = functools.partial(policy_act_kernel, num_actions=A)

    feat_bytes = features.size * features.dtype.itemsize
    w_bytes = w_fused.size * w_fused.dtype.itemsize

    out = pl.pallas_call(
        kernel,
        out_shape=jax.ShapeDtypeStruct((B_pad, 128), jnp.float32),
        grid=(grid_b,),
        in_specs=[
            pl.BlockSpec((bb, H), lambda i: (i, 0)),       # features: tiled over B
            pl.BlockSpec((H, C), lambda i: (0, 0)),        # fused weight: resident
            pl.BlockSpec((1, C), lambda i: (0, 0)),        # fused bias: resident
        ],
        out_specs=pl.BlockSpec((bb, 128), lambda i: (i, 0)),
        compiler_params=pltpu.CompilerParams(
            dimension_semantics=("parallel",)),
        cost_estimate=pl.CostEstimate(
            flops=2 * B_pad * H * C + 8 * B_pad * C,
            transcendentals=B_pad * C,
            bytes_accessed=feat_bytes + w_bytes + b_fused.size * 4 + B_pad * 128 * 4,
        ),
    )(features, w_fused, b_fused)

    value = out[:B, 0:1]
    action_log_probs = out[:B, 1:2]
    action = out[:B, 2:3].astype(jnp.int32)   # float-encoded int, exact for A < 2^24
    return value, action, action_log_probs


def _orthogonal(key, rows, cols):
    # deterministic orthogonal init (matches nn.init.orthogonal_ semantics)
    a = jax.random.normal(key, (max(rows, cols), min(rows, cols)), jnp.float32)
    q, r = jnp.linalg.qr(a)
    q = q * jnp.sign(jnp.diagonal(r))[None, :]
    q = q[:rows, :cols] if rows >= cols else q.T[:rows, :cols]
    return q


if __name__ == "__main__":
    key = jax.random.PRNGKey(0)
    k_feat, k_wa, k_wc = jax.random.split(key, 3)

    B, H, A = 8, 32, 4   # batch, net.output_size, dim_actions

    features = jax.random.normal(k_feat, (B, H), jnp.float32)

    # CategoricalNet linear: weight (A, H) orthogonal, bias 0 -> store transposed (H, A)
    wa_t = _orthogonal(k_wa, A, H)          # (A, H)
    wa = wa_t.T                             # (H, A)
    ba = jnp.zeros((1, A), jnp.float32)

    # CriticHead: weight (1, H) orthogonal (unit-norm row), bias 0 -> transposed (H, 1)
    wc_row = jax.random.normal(k_wc, (1, H), jnp.float32)
    wc_row = wc_row / jnp.linalg.norm(wc_row)
    wc = wc_row.T                           # (H, 1)
    bc = jnp.zeros((1, 1), jnp.float32)

    # --- reference in plain JAX ---
    logits_ref = features @ wa + ba
    value_ref = features @ wc + bc
    lp_ref = jax.nn.log_softmax(logits_ref, axis=-1)
    act_ref = jnp.argmax(logits_ref, axis=-1)
    alp_ref = jnp.take_along_axis(lp_ref, act_ref[:, None], axis=-1)

    # --- f32 path (exact check) ---
    w32, b32 = make_fused_params(wa, ba, wc, bc, dtype=jnp.float32)   # hoisted / cached
    value, action, action_log_probs = policy_act(features, w32, b32, num_actions=A)
    jax.block_until_ready((value, action, action_log_probs))

    assert jnp.allclose(value, value_ref, atol=1e-5)
    assert jnp.array_equal(action[:, 0], act_ref)
    assert jnp.allclose(action_log_probs, alp_ref, atol=1e-5)

    # --- bf16 fast path (halves feature-read bytes; loose tolerance) ---
    wbf, bbf = make_fused_params(wa, ba, wc, bc, dtype=jnp.bfloat16)
    v_bf, a_bf, alp_bf = policy_act(features, wbf, bbf, num_actions=A)
    jax.block_until_ready((v_bf, a_bf, alp_bf))
    assert jnp.allclose(v_bf, value_ref, atol=5e-2)
    assert jnp.allclose(alp_bf, alp_ref, atol=5e-2)

    print("KERNEL_OK")
</pallas_src>

<mosaic_0001>
module attributes {stable_mosaic.version = 11 : i64} {
  func.func @policy_act_kernel(%arg0: i32, %arg1: memref<8x32xf32, #tpu.memory_space<vmem>>, %arg2: memref<32x128xf32, #tpu.memory_space<vmem>>, %arg3: memref<1x128xf32, #tpu.memory_space<vmem>>, %arg4: memref<8x128xf32, #tpu.memory_space<vmem>>) attributes {dimension_semantics = [#tpu.dimension_semantics<parallel>], iteration_bounds = array<i64: 1>, scalar_prefetch = 0 : i64, scratch_operands = 0 : i64, tpu.core_type = #tpu.core_type<tc>, window_params = [{transform_indices = @transform_0, window_bounds = array<i64: 8, 32>}, {pipeline_mode = #tpu.pipeline_mode<synchronous>, transform_indices = @transform_1, window_bounds = array<i64: 32, 128>}, {pipeline_mode = #tpu.pipeline_mode<synchronous>, transform_indices = @transform_2, window_bounds = array<i64: 1, 128>}, {transform_indices = @transform_3, window_bounds = array<i64: 8, 128>}]} {
    %c0 = arith.constant 0 : index
    %c0_0 = arith.constant 0 : index
    %0 = vector.load %arg1[%c0, %c0_0] : memref<8x32xf32, #tpu.memory_space<vmem>>, vector<8x32xf32>
    %c0_1 = arith.constant 0 : index
    %c0_2 = arith.constant 0 : index
    %1 = vector.load %arg2[%c0_1, %c0_2] : memref<32x128xf32, #tpu.memory_space<vmem>>, vector<32x128xf32>
    %cst = arith.constant dense<0.000000e+00> : vector<8x128xf32>
    %2 = tpu.matmul %0, %1, %cst {dimension_numbers = #tpu.dot_dimension_numbers<[1], [0], [0], [1], [0, 0, 1, 1], [], []>} : vector<8x32xf32>, vector<32x128xf32>, vector<8x128xf32> -> vector<8x128xf32>
    %c0_3 = arith.constant 0 : index
    %c0_4 = arith.constant 0 : index
    %3 = vector.load %arg3[%c0_3, %c0_4] : memref<1x128xf32, #tpu.memory_space<vmem>>, vector<1x128xf32>
    %4 = vector.broadcast %3 : vector<1x128xf32> to vector<8x128xf32>
    %5 = arith.addf %2, %4 : vector<8x128xf32>
    %6 = tpu.iota {dimensions = array<i32: 1>} : vector<8x128xi32>
    %c4_i32 = arith.constant 4 : i32
    %7 = vector.broadcast %c4_i32 : i32 to vector<8x128xi32>
    %8 = arith.cmpi slt, %6, %7 : vector<8x128xi32>
    %cst_5 = arith.constant 0xFF800000 : f32
    %9 = vector.broadcast %cst_5 : f32 to vector<8x128xf32>
    %10 = arith.select %8, %5, %9 : vector<8x128xi1>, vector<8x128xf32>
    %cst_6 = arith.constant dense<0xFF800000> : vector<8xf32>
    %11 = vector.multi_reduction <maximumf>, %10, %cst_6 [1] : vector<8x128xf32> to vector<8xf32>
    %12 = vector.shape_cast %11 : vector<8xf32> to vector<8x1xf32>
    %13 = vector.broadcast %12 : vector<8x1xf32> to vector<8x128xf32>
    %14 = arith.subf %10, %13 : vector<8x128xf32>
    %15 = math.exp %14 : vector<8x128xf32>
    %cst_7 = arith.constant dense<0.000000e+00> : vector<8xf32>
    %16 = vector.multi_reduction <add>, %15, %cst_7 [1] : vector<8x128xf32> to vector<8xf32>
    %17 = vector.shape_cast %16 : vector<8xf32> to vector<8x1xf32>
    %18 = math.log %17 : vector<8x1xf32>
    %cst_8 = arith.constant 0.000000e+00 : f32
    %19 = vector.broadcast %cst_8 : f32 to vector<8x1xf32>
    %20 = arith.subf %19, %18 : vector<8x1xf32>
    %21 = tpu.reduce_index %10 {axis = 1 : i32, kind = #tpu.reduction_kind<arg_max>} : vector<8x128xf32> -> vector<8xi32>
    %22 = arith.sitofp %21 : vector<8xi32> to vector<8xf32>
    %23 = vector.shape_cast %22 : vector<8xf32> to vector<8x1xf32>
    %24 = vector.extract_strided_slice %5 {offsets = [0, 4], sizes = [8, 1], strides = [1, 1]} : vector<8x128xf32> to vector<8x1xf32>
    %25 = tpu.iota {dimensions = array<i32: 1>} : vector<8x128xi32>
    %c0_i32 = arith.constant 0 : i32
    %26 = vector.broadcast %c0_i32 : i32 to vector<8x128xi32>
    %27 = arith.cmpi eq, %25, %26 : vector<8x128xi32>
    %c1_i32 = arith.constant 1 : i32
    %28 = vector.broadcast %c1_i32 : i32 to vector<8x128xi32>
    %29 = arith.cmpi eq, %25, %28 : vector<8x128xi32>
    %c2_i32 = arith.constant 2 : i32
    %30 = vector.broadcast %c2_i32 : i32 to vector<8x128xi32>
    %31 = arith.cmpi eq, %25, %30 : vector<8x128xi32>
    %cst_9 = arith.constant 0.000000e+00 : f32
    %32 = vector.shape_cast %23 : vector<8x1xf32> to vector<8x1xf32>
    %33 = vector.broadcast %32 : vector<8x1xf32> to vector<8x128xf32>
    %34 = vector.broadcast %cst_9 : f32 to vector<8x128xf32>
    %35 = arith.select %31, %33, %34 : vector<8x128xi1>, vector<8x128xf32>
    %36 = vector.shape_cast %20 : vector<8x1xf32> to vector<8x1xf32>
    %37 = vector.broadcast %36 : vector<8x1xf32> to vector<8x128xf32>
    %38 = arith.select %29, %37, %35 : vector<8x128xi1>, vector<8x128xf32>
    %39 = vector.shape_cast %24 : vector<8x1xf32> to vector<8x1xf32>
    %40 = vector.broadcast %39 : vector<8x1xf32> to vector<8x128xf32>
    %41 = arith.select %27, %40, %38 : vector<8x128xi1>, vector<8x128xf32>
    %c0_10 = arith.constant 0 : index
    %c0_11 = arith.constant 0 : index
    %42 = vector.load %arg4[%c0_10, %c0_11] : memref<8x128xf32, #tpu.memory_space<vmem>>, vector<8x128xf32>
    tpu.vector_store %arg4[%c0_10, %c0_11], %41 {strides = array<i32>} : memref<8x128xf32, #tpu.memory_space<vmem>>, vector<8x128xf32>,
    return
  }
  func.func @transform_0(%arg0: i32) -> (i32, i32) {
    %c0_i32 = arith.constant 0 : i32
    %c0_i32_0 = arith.constant 0 : i32
    return %arg0, %c0_i32 : i32, i32
  }
  func.func @transform_1(%arg0: i32) -> (i32, i32) {
    %c0_i32 = arith.constant 0 : i32
    %c0_i32_0 = arith.constant 0 : i32
    %c0_i32_1 = arith.constant 0 : i32
    return %c0_i32, %c0_i32_0 : i32, i32
  }
  func.func @transform_2(%arg0: i32) -> (i32, i32) {
    %c0_i32 = arith.constant 0 : i32
    %c0_i32_0 = arith.constant 0 : i32
    %c0_i32_1 = arith.constant 0 : i32
    return %c0_i32, %c0_i32_0 : i32, i32
  }
  func.func @transform_3(%arg0: i32) -> (i32, i32) {
    %c0_i32 = arith.constant 0 : i32
    %c0_i32_0 = arith.constant 0 : i32
    return %arg0, %c0_i32 : i32, i32
  }
}

</mosaic_0001>

<llo_original>
// kernel: tpu_custom_call.1
$region0: #{tpu_custom_call.1}
  #allocation0 [shape = 'u32[]', space=smem, size = 0x4, offset = 0x4, fixed_abs, tag = 'smem constant byte address 0x4 - core index']
  #allocation1 [shape = 'u32[144,128]{1,0:T(1,128)}', space=vmem, size = 0x12000, scoped, tag = 'internal scratch']
  %s0 = inlined_call_operand.hbm [shape: f32[8,32], index: 0, kind: input, shape index: {}]
  %s1 = inlined_call_operand.hbm [shape: f32[32,128], index: 1, kind: input, shape index: {}]
  %s2 = inlined_call_operand.vmem [shape: f32[1,128], index: 2, kind: input, shape index: {}]
  %s3 = inlined_call_operand.hbm [shape: f32[8,128], index: 3, kind: output, shape index: {}]
  %s4 = sld [smem:[#allocation0]]
  $region30: #{tpu_custom_call.1} parent=0
    _
  %s6 = ssub.s32 1, %s4
  %s7 = scalar_select 0, %s6, %s4
  $region1: #{tpu_custom_call.1} parent=0
    #allocation2 [shape = 'u8[4096]{0}', space=vmem, size = 0x1000, scoped, tag = 'input window, operand 0, single buffered']
    #allocation3 [shape = 's32[1]{0}', space=sflag, size = 0x4, scoped, tag = 'scoped memory for tpu_custom_call.1']
    #allocation4 [shape = 's32[1]{0}', space=sflag, size = 0x4, scoped, tag = 'scoped memory for tpu_custom_call.1']
    #allocation5 [shape = 'u8[16384]{0}', space=vmem, size = 0x4000, scoped, tag = 'input window, operand 1, single buffered']
    #allocation6 [shape = 's32[1]{0}', space=sflag, size = 0x4, scoped, tag = 'scoped memory for tpu_custom_call.1']
    #allocation7 [shape = 'u8[4096]{0}', space=vmem, size = 0x1000, scoped, tag = 'output window, operand 0, single buffered']
    %8 = vsyncpa [#allocation3], 0
    %9 = vsyncpa [#allocation6], 0
    %10 = vsyncpa [#allocation4], 0
    // Predicated region
    $region2: #{tpu_custom_call.1} parent=1 // pred_check
      _
    $region3: #{tpu_custom_call.1} parent=1 // pred_check_branch
      %12 = sbr.rel (0) target = $region5
    $region4: #{tpu_custom_call.1} parent=1 // pred_region
      %s14 = ssub.s32 128, 128
      %15 = vsyncadd [#allocation3], %s14
      %s17 = sshll.u32 [#allocation2], 4
      %s18 = int_to_ptr.vmem [resolvable:$true] %s17
      %20 = dma.hbm_to_vmem [thread:$0]  %s0, 128, %s18, [#allocation3]
    $region5: #{tpu_custom_call.1} parent=1 // pred_fallthru
      _
    // Predicated region
    $region6: #{tpu_custom_call.1} parent=1 // pred_check
      _
    $region7: #{tpu_custom_call.1} parent=1 // pred_check_branch
      %22 = sbr.rel (0) target = $region9
    $region8: #{tpu_custom_call.1} parent=1 // pred_region
      %s24 = ssub.s32 512, 512
      %25 = vsyncadd [#allocation6], %s24
      %s26 = sshll.u32 [#allocation5], 4
      %s27 = int_to_ptr.vmem [resolvable:$true] %s26
      %32 = dma.hbm_to_vmem [thread:$0]  %s1, 512, %s27, [#allocation6], 128, 128, 8
    $region9: #{tpu_custom_call.1} parent=1 // pred_fallthru
      _
    // Predicated region
    $region10: #{tpu_custom_call.1} parent=1 // pred_check
      _
    $region11: #{tpu_custom_call.1} parent=1 // pred_check_branch
      %34 = sbr.rel (0) target = $region13
    $region12: #{tpu_custom_call.1} parent=1 // pred_region
      _
    $region13: #{tpu_custom_call.1} parent=1 // pred_fallthru
      _
    // Predicated region
    $region14: #{tpu_custom_call.1} parent=1 // pred_check
      _
    $region15: #{tpu_custom_call.1} parent=1 // pred_check_branch
      %36 = sbr.rel (0) target = $region17
    $region16: #{tpu_custom_call.1} parent=1 // pred_region
      %37 = dma.done [#allocation3], 128
    $region17: #{tpu_custom_call.1} parent=1 // pred_fallthru
      _
    // Predicated region
    $region18: #{tpu_custom_call.1} parent=1 // pred_check
      _
    $region19: #{tpu_custom_call.1} parent=1 // pred_check_branch
      %39 = sbr.rel (0) target = $region21
    $region20: #{tpu_custom_call.1} parent=1 // pred_region
      %40 = dma.done [#allocation6], 512
    $region21: #{tpu_custom_call.1} parent=1 // pred_fallthru
      _
    %v41 = vld [vmem:[#allocation2] sm:$0xff]
    %v42 = vld [vmem:[#allocation5] sm:$0xff]
    %v43 = vld [vmem:[#allocation5 + $0x8] sm:$0xff]
    %v44 = vld [vmem:[#allocation5 + $0x10] sm:$0xff]
    %v45 = vld [vmem:[#allocation5 + $0x18] sm:$0xff]
    %v46 = vld [vmem:[%s2] sm:$0x1]
    %v48 = vlaneseq
    %v49 = vshrl.u32 %v48, 7
    %v50 = vsub.s32 0, %v49
    %v51 = vrot.slane %v46, %v50
    %vm53 = vcmask 261120
    %v55 = vsel %vm53, %v41, 0
    %57 = vmatprep.subr.mxu0 0.0
    %58 = vmatpush1.msra.mxu0 %v42
    %59 = vmatprep.subr.mxu0 0.0
    %60 = vmatpush1.msra.mxu0 %v43
    %61 = vmatprep.subr.mxu0 0.0
    %62 = vmatpush1.msra.mxu0 %v44
    %63 = vmatprep.subr.mxu0 0.0
    %64 = vmatpush1.msra.mxu0 %v45
    %65 = vmatprep.subr.mxu0 0.0
    %66 = vmatpush1.msra.mxu0 0.0
    %67 = vmatprep.subr.mxu0 0.0
    %68 = vmatpush1.msra.mxu0 0.0
    %69 = vmatprep.subr.mxu0 0.0
    %70 = vmatpush1.msra.mxu0 0.0
    %71 = vmatprep.subr.mxu0 0.0
    %72 = vmatpush1.msra.mxu0 0.0
    %73 = vmatprep.subr.mxu0 0.0
    %74 = vmatpush1.msra.mxu0 0.0
    %75 = vmatprep.subr.mxu0 0.0
    %76 = vmatpush1.msra.mxu0 0.0
    %77 = vmatprep.subr.mxu0 0.0
    %78 = vmatpush1.msra.mxu0 0.0
    %79 = vmatprep.subr.mxu0 0.0
    %80 = vmatpush1.msra.mxu0 0.0
    %81 = vmatprep.subr.mxu0 0.0
    %82 = vmatpush1.msra.mxu0 0.0
    %83 = vmatprep.subr.mxu0 0.0
    %84 = vmatpush1.msra.mxu0 0.0
    %85 = vmatprep.subr.mxu0 0.0
    %86 = vmatpush1.msra.mxu0 0.0
    %87 = vmatprep.subr.mxu0 0.0
    %88 = vmatpush1.msra.mxu0 0.0
    %89 = vmatprep.subr.mxu0 0.0
    %90 = vmatpush1.msra.mxu0 0.0
    %91 = vmatprep.subr.mxu0 0.0
    %92 = vmatpush1.msra.mxu0 0.0
    %93 = vmatprep.subr.mxu0 0.0
    %94 = vmatpush1.msra.mxu0 0.0
    %95 = vmatprep.subr.mxu0 0.0
    %96 = vmatpush1.msra.mxu0 0.0
    %97 = vmatprep.subr.mxu0 0.0
    %98 = vmatpush1.msra.mxu0 0.0
    %99 = vmatprep.subr.mxu0 0.0
    %100 = vmatpush1.msra.mxu0 0.0
    %101 = vmatprep.subr.mxu0 0.0
    %102 = vmatpush1.msra.mxu0 0.0
    %103 = vmatprep.subr.mxu0 0.0
    %104 = vmatpush1.msra.mxu0 0.0
    %105 = vmatprep.subr.mxu0 0.0
    %106 = vmatpush1.msra.mxu0 0.0
    %107 = vmatprep.subr.mxu0 0.0
    %108 = vmatpush1.msra.mxu0 0.0
    %109 = vmatprep.subr.mxu0 0.0
    %110 = vmatpush1.msra.mxu0 0.0
    %111 = vmatprep.subr.mxu0 0.0
    %112 = vmatpush1.msra.mxu0 0.0
    %113 = vmatprep.subr.mxu0 0.0
    %114 = vmatpush1.msra.mxu0 0.0
    %115 = vmatprep.subr.mxu0 0.0
    %116 = vmatpush1.msra.mxu0 0.0
    %117 = vmatprep.subr.mxu0 0.0
    %118 = vmatpush1.msra.mxu0 0.0
    %119 = vmatprep.subr.mxu0 0.0
    %120 = vmatpush1.msra.mxu0 0.0
    %121 = vmatprep.mubr.f32.mxu0 0.0
    %122 = vmatmul.mubr.f32.gmra.mrb[0].mxu0 %v55
    %v123 = vpop.f32.mrb[0].mxu0
    %v124 = vadd.f32 %v51, %v123
    %v125 = vpop.f32.mrb[0].mxu0
    %126 = vdwg.mxu0
    %v127 = vlaneseq
    %v128 = vand.u32 %v127, 127
    %vm129 = vcmp.lt.s32.totalorder %v128, 4
    %v130 = vsel %vm129, %v124, -inf
    %131 = vmax.xlane.f32.xlu0 %v130
    %v132 = vpop.xlane.xlu0 %131
    %v133 = vsub.f32 %v130, %v132
    %v134 = vmul.f32 %v133, 1.442695
    %v135 = vpow.pop %v134
    %136 = vadd.xlane.f32.xlu0 %v135
    %v137 = vpop.xlane.xlu0 %136
    %v138 = vlog2.pop %v137
    %v139 = vmul.f32 %v138, 0.6931472
    %v140 = vsub.f32 0.0, %v139
    %141 = vmax.index.xlane.f32.xlu0 %v130
    %v142 = vpop.xlane.xlu0 %141
    %v143 = vcvt.s32.f32 %v142
    %vm144 = vcmp.eq.s32.totalorder %v128, 0
    %vm145 = vcmp.eq.s32.totalorder %v128, 1
    %vm146 = vcmp.eq.s32.totalorder %v128, 2
    %v147 = vsel %vm146, %v143, 0.0
    %v148 = vsel %vm145, %v140, %v147
    %150 = vset.pattern.permute.xlu0 4
    %151 = vperm.xlu0 %150, %v124
    %v152 = vpop.permute.xlu0 %151
    %v154 = vsel %vm144, %v152, %v148
    %155 = vst [vmem:[#allocation7] sm:$0xff] %v154
    // Predicated region
    $region22: #{tpu_custom_call.1} parent=1 // pred_check
      _
    $region23: #{tpu_custom_call.1} parent=1 // pred_check_branch
      %157 = sbr.rel (0) target = $region25
    $region24: #{tpu_custom_call.1} parent=1 // pred_region
      %s159 = ssub.s32 128, 128
      %160 = vsyncadd [#allocation4], %s159
      %s162 = sshll.u32 [#allocation7], 4
      %s163 = int_to_ptr.vmem [resolvable:$true] %s162
      %165 = dma.vmem_to_hbm [thread:$0]  %s163, 128, %s3, [#allocation4]
    $region25: #{tpu_custom_call.1} parent=1 // pred_fallthru
      _
    // Predicated region
    $region26: #{tpu_custom_call.1} parent=1 // pred_check
      _
    $region27: #{tpu_custom_call.1} parent=1 // pred_check_branch
      %167 = sbr.rel (0) target = $region29
    $region28: #{tpu_custom_call.1} parent=1 // pred_region
      %168 = dma.done [#allocation4], 128
    $region29: #{tpu_custom_call.1} parent=1 // pred_fallthru
      _
    %169 = vsyncpa [#allocation3], 1
    %170 = vsyncpa [#allocation6], 1
    %171 = vsyncpa [#allocation4], 1

</llo_original>
